<compile_context>
chip_gen: v5e
topology: v5e:2x2
jax: 0.10.0
libtpu: 0.0.40
codegen_flags: <defaults>
</compile_context>

<pallas_src>
import jax
import jax.numpy as jnp
from jax.experimental import pallas as pl
from jax.experimental.pallas import tpu as pltpu

KERNEL_SIZE = 4
STRIDE = 2
PADDING = 1


def _downsample_kernel(x2_ref, halo_ref, w_ref, b_ref, o_ref):
    """One (batch b, L tile j) step of the stride-2 / k=4 conv.

    x2_ref:   (TL, 2*C_in)   x2[t] = [x[2t], x[2t+1]]
    halo_ref: (2, C_in)      row 0 = x[2*t0 - 1], row 1 = x[2*(t0+TL)]
                             (zero rows realize the conv's padding=1)
    w_ref:    (4*C_in, C_out)  stacked [Wmid (2C); W0 (C); W3 (C)]
    b_ref:    (1, C_out)     bias (f32)
    o_ref:    (TL, C_out)
    """
    two_c = x2_ref.shape[1]
    c_in = two_c // 2

    x2 = x2_ref[...]
    x_even = x2[:, :c_in]            # x[2t]
    x_odd = x2[:, c_in:]             # x[2t+1]

    # Half-width shifted taps:
    #   prev[r] = x[2*(t0+r) - 1]   (odd half of previous x2 row / left halo)
    #   next[r] = x[2*(t0+r) + 2]   (even half of next x2 row / right halo)
    # TODO(synk): a pltpu.roll-based shift (XLU) with a one-row fix-up would
    # free vld/vst slots further; the half-width concat already halves the
    # copied bytes vs v2 and is kept for robustness.
    prev = jnp.concatenate([halo_ref[0:1, :], x_odd[:-1, :]], axis=0)
    nxt = jnp.concatenate([x_even[1:, :], halo_ref[1:2, :]], axis=0)

    w_mid = w_ref[0:two_c, :]
    w0 = w_ref[two_c:two_c + c_in, :]
    w3 = w_ref[two_c + c_in:two_c + 2 * c_in, :]

    acc = jnp.dot(x2, w_mid, preferred_element_type=jnp.float32)
    acc = acc + jnp.dot(prev, w0, preferred_element_type=jnp.float32)
    acc = acc + jnp.dot(nxt, w3, preferred_element_type=jnp.float32)
    o_ref[...] = (acc + b_ref[...]).astype(o_ref.dtype)


def _physical_vmem_bytes():
    try:
        info = pltpu.get_tpu_info()
        return int(getattr(info, "vmem_capacity_bytes", 64 * 1024 * 1024))
    except Exception:
        return 64 * 1024 * 1024          # conservative v7x per-TC default


def _tile_vmem_bytes(tl, c_in, c_out, in_bytes, out_bytes):
    x2_buf = 2 * tl * 2 * c_in * in_bytes        # double-buffered input tile
    out_buf = 2 * tl * c_out * out_bytes         # double-buffered output tile
    acc = tl * c_out * 4                         # f32 accumulator
    shifts = 2 * tl * c_in * in_bytes            # prev/next half-width copies
    halo = 2 * 2 * c_in * in_bytes
    weights = 2 * (4 * c_in * c_out * in_bytes + c_out * 4)
    return x2_buf + out_buf + acc + shifts + halo + weights


def _pick_l_tile(l_out, c_in, c_out, in_bytes, out_bytes, budget, max_tile):
    """Largest multiple-of-8 divisor of l_out within the VMEM budget."""
    best = None
    cap = min(l_out, max_tile)
    for tl in range(8, cap + 1, 8):
        if l_out % tl != 0:
            continue
        if _tile_vmem_bytes(tl, c_in, c_out, in_bytes, out_bytes) <= budget:
            best = tl
    if best is None:
        # TODO(synk): L_out values with no multiple-of-8 divisor fall back to
        # one full-length tile per batch (ragged last tiles are unhandled).
        best = l_out
    return best


def downsample_forward(x, weight, bias, *, compute_dtype=None,
                       pad_output_channels=False, max_l_tile=2048):
    """x: (B, L, C_in); weight: (C_out, C_in, 4); bias: (C_out,).

    compute_dtype=jnp.bfloat16 enables the bf16 HBM path (f32 accumulation is
    kept in-kernel); default keeps the input dtype for PyTorch parity.
    pad_output_channels=True returns a lane-dense (C_out padded to 128) output
    for consumers that fold the pad into the next layer (no trim pass either way).
    """
    B, L, C_in = x.shape
    C_out, C_in_w, K = weight.shape
    assert K == KERNEL_SIZE and C_in_w == C_in
    # TODO(synk): odd L (never produced along Hist_Histoformer's U-Net path)
    # is not supported by the even/odd reshape trick.
    assert L % STRIDE == 0, "Downsample Pallas kernel requires an even sequence length"
    L_out = L // STRIDE

    cdtype = jnp.dtype(compute_dtype) if compute_dtype is not None else x.dtype
    in_bytes = jnp.dtype(cdtype).itemsize
    out_bytes = in_bytes

    C_out_k = ((C_out + 127) // 128) * 128 if pad_output_channels else C_out

    vmem_phys = _physical_vmem_bytes()
    vmem_limit = int(vmem_phys * 0.8)
    tile_budget = int(vmem_limit * 0.75)

    TL = _pick_l_tile(L_out, C_in, C_out_k, in_bytes, out_bytes,
                      tile_budget, max_l_tile)
    # v7x megacore: make sure there are >= 2 grid steps so both TCs get work.
    if B * (L_out // TL) < 2:
        half = TL // 2
        if half >= 8 and half % 8 == 0 and L_out % half == 0:
            TL = half
    NJ = L_out // TL
    twoC = 2 * C_in

    # Free, contiguous reshape: x2[b, t] = [x[b, 2t], x[b, 2t+1]].
    x2 = x.reshape(B, L_out, twoC)
    if x2.dtype != cdtype:
        # Only a real HBM saving when the producer already emits `cdtype`.
        x2 = x2.astype(cdtype)

    # Per-tile halo rows (tiny gather). Zero rows realize the conv's padding=1.
    j_idx = jnp.arange(NJ)
    l_rows = j_idx * TL - 1            # -1 for the first tile  -> zero row
    r_rows = (j_idx + 1) * TL          # L_out for the last tile -> zero row
    lh = jnp.where((l_rows >= 0)[None, :, None],
                   x2[:, jnp.clip(l_rows, 0, L_out - 1), C_in:], 0)
    rh = jnp.where((r_rows < L_out)[None, :, None],
                   x2[:, jnp.clip(r_rows, 0, L_out - 1), :C_in], 0)
    halos = jnp.stack([lh, rh], axis=2).astype(cdtype)   # (B, NJ, 2, C_in)

    # Conv taps as matmul weights:
    #   out[t] = x[2t-1]@W0 + x[2t]@W1 + x[2t+1]@W2 + x[2t+2]@W3 + b
    w_t = jnp.transpose(weight, (2, 1, 0))                    # (K, C_in, C_out)
    w_mid = jnp.concatenate([w_t[1], w_t[2]], axis=0)         # (2C, C_out)
    w_all = jnp.concatenate([w_mid, w_t[0], w_t[3]], axis=0)  # (4C, C_out)
    b_row = bias.reshape(1, C_out).astype(jnp.float32)
    if C_out_k != C_out:
        w_all = jnp.pad(w_all, ((0, 0), (0, C_out_k - C_out)))
        b_row = jnp.pad(b_row, ((0, 0), (0, C_out_k - C_out)))
    w_all = w_all.astype(cdtype)

    out = pl.pallas_call(
        _downsample_kernel,
        out_shape=jax.ShapeDtypeStruct((B, L_out, C_out_k), cdtype),
        grid_spec=pltpu.PrefetchScalarGridSpec(
            num_scalar_prefetch=0,
            grid=(B, NJ),
            in_specs=[
                pl.BlockSpec((pl.Squeezed(), TL, twoC),
                             lambda b, j: (b, j, 0)),
                pl.BlockSpec((pl.Squeezed(), pl.Squeezed(), 2, C_in),
                             lambda b, j: (b, j, 0, 0)),
                pl.BlockSpec((4 * C_in, C_out_k), lambda b, j: (0, 0)),
                pl.BlockSpec((1, C_out_k), lambda b, j: (0, 0)),
            ],
            out_specs=pl.BlockSpec((pl.Squeezed(), TL, C_out_k),
                                   lambda b, j: (b, j, 0)),
        ),
        compiler_params=pltpu.CompilerParams(
            dimension_semantics=("parallel", "parallel"),
            vmem_limit_bytes=vmem_limit),
    )(x2, halos, w_all, b_row)
    return out


def _reference(x, weight, bias):
    y = jax.lax.conv_general_dilated(
        jnp.transpose(x, (0, 2, 1)), weight,
        window_strides=(STRIDE,), padding=((PADDING, PADDING),),
        dimension_numbers=("NCH", "OIH", "NCH"))
    return jnp.transpose(y + bias[None, :, None], (0, 2, 1))


if __name__ == "__main__":
    key = jax.random.PRNGKey(0)
    kx, kw, kb = jax.random.split(key, 3)

    B, L, C_in, C_out = 2, 16, 4, 8
    x = jax.random.normal(kx, (B, L, C_in), dtype=jnp.float32)
    bound = 1.0 / (C_in * KERNEL_SIZE) ** 0.5
    weight = jax.random.uniform(kw, (C_out, C_in, KERNEL_SIZE),
                                minval=-bound, maxval=bound, dtype=jnp.float32)
    bias = jax.random.uniform(kb, (C_out,),
                              minval=-bound, maxval=bound, dtype=jnp.float32)

    # f32 (PyTorch-parity) path, single L tile per batch (zero halos).
    out = jax.block_until_ready(downsample_forward(x, weight, bias))
    ref = _reference(x, weight, bias)
    assert out.shape == (B, L // STRIDE, C_out), out.shape
    assert jnp.allclose(out, ref, atol=1e-5, rtol=1e-5)

    # Multi-tile path (exercises inter-tile halos): L_out = 32, TL = 8.
    L2 = 64
    x_long = jax.random.normal(kx, (B, L2, C_in), dtype=jnp.float32)
    out2 = jax.block_until_ready(
        downsample_forward(x_long, weight, bias, max_l_tile=8))
    ref2 = _reference(x_long, weight, bias)
    assert out2.shape == (B, L2 // STRIDE, C_out), out2.shape
    assert jnp.allclose(out2, ref2, atol=1e-5, rtol=1e-5)

    # Opt-in bf16 data path (halves HBM bytes; f32 accumulation kept).
    out_bf = jax.block_until_ready(
        downsample_forward(x_long, weight, bias,
                           compute_dtype=jnp.bfloat16, max_l_tile=8))
    assert out_bf.shape == (B, L2 // STRIDE, C_out), out_bf.shape
    assert out_bf.dtype == jnp.bfloat16
    assert jnp.allclose(out_bf.astype(jnp.float32), ref2, atol=1e-1, rtol=1e-1)

    print("KERNEL_OK")
</pallas_src>

<mosaic_0001>
module attributes {stable_mosaic.version = 11 : i64} {
  func.func @_downsample_kernel(%arg0: i32, %arg1: i32, %arg2: memref<1x8x8xf32, #tpu.memory_space<vmem>>, %arg3: memref<1x1x2x4xf32, #tpu.memory_space<vmem>>, %arg4: memref<16x8xf32, #tpu.memory_space<vmem>>, %arg5: memref<1x8xf32, #tpu.memory_space<vmem>>, %arg6: memref<1x8x8xf32, #tpu.memory_space<vmem>>) attributes {dimension_semantics = [#tpu.dimension_semantics<parallel>, #tpu.dimension_semantics<parallel>], iteration_bounds = array<i64: 2, 1>, scalar_prefetch = 0 : i64, scratch_operands = 0 : i64, tpu.core_type = #tpu.core_type<tc>, window_params = [{transform_indices = @transform_0, window_bounds = array<i64: 1, 8, 8>}, {transform_indices = @transform_1, window_bounds = array<i64: 1, 1, 2, 4>}, {pipeline_mode = #tpu.pipeline_mode<synchronous>, transform_indices = @transform_2, window_bounds = array<i64: 16, 8>}, {pipeline_mode = #tpu.pipeline_mode<synchronous>, transform_indices = @transform_3, window_bounds = array<i64: 1, 8>}, {transform_indices = @transform_4, window_bounds = array<i64: 1, 8, 8>}]} {
    %c0 = arith.constant 0 : index
    %c0_0 = arith.constant 0 : index
    %c0_1 = arith.constant 0 : index
    %0 = vector.load %arg2[%c0, %c0_0, %c0_1] : memref<1x8x8xf32, #tpu.memory_space<vmem>>, vector<1x8x8xf32>
    %1 = vector.shape_cast %0 : vector<1x8x8xf32> to vector<8x8xf32>
    %2 = vector.extract_strided_slice %1 {offsets = [0, 0], sizes = [8, 4], strides = [1, 1]} : vector<8x8xf32> to vector<8x4xf32>
    %3 = vector.extract_strided_slice %1 {offsets = [0, 4], sizes = [8, 4], strides = [1, 1]} : vector<8x8xf32> to vector<8x4xf32>
    %c0_2 = arith.constant 0 : index
    %c0_3 = arith.constant 0 : index
    %c0_4 = arith.constant 0 : index
    %c0_5 = arith.constant 0 : index
    %4 = vector.load %arg3[%c0_2, %c0_3, %c0_4, %c0_5] : memref<1x1x2x4xf32, #tpu.memory_space<vmem>>, vector<1x1x1x4xf32>
    %5 = vector.shape_cast %4 : vector<1x1x1x4xf32> to vector<1x4xf32>
    %6 = vector.extract_strided_slice %3 {offsets = [0, 0], sizes = [7, 4], strides = [1, 1]} : vector<8x4xf32> to vector<7x4xf32>
    %7 = tpu.concatenate %5, %6 in 0 : vector<1x4xf32>, vector<7x4xf32> -> vector<8x4xf32>
    %8 = vector.extract_strided_slice %2 {offsets = [1, 0], sizes = [7, 4], strides = [1, 1]} : vector<8x4xf32> to vector<7x4xf32>
    %c0_6 = arith.constant 0 : index
    %c0_7 = arith.constant 0 : index
    %c1 = arith.constant 1 : index
    %c0_8 = arith.constant 0 : index
    %9 = vector.load %arg3[%c0_6, %c0_7, %c1, %c0_8] : memref<1x1x2x4xf32, #tpu.memory_space<vmem>>, vector<1x1x1x4xf32>
    %10 = vector.shape_cast %9 : vector<1x1x1x4xf32> to vector<1x4xf32>
    %11 = tpu.concatenate %8, %10 in 0 : vector<7x4xf32>, vector<1x4xf32> -> vector<8x4xf32>
    %c0_9 = arith.constant 0 : index
    %c0_10 = arith.constant 0 : index
    %12 = vector.load %arg4[%c0_9, %c0_10] : memref<16x8xf32, #tpu.memory_space<vmem>>, vector<8x8xf32>
    %c8 = arith.constant 8 : index
    %c0_11 = arith.constant 0 : index
    %13 = vector.load %arg4[%c8, %c0_11] : memref<16x8xf32, #tpu.memory_space<vmem>>, vector<4x8xf32>
    %c12 = arith.constant 12 : index
    %c0_12 = arith.constant 0 : index
    %14 = vector.load %arg4[%c12, %c0_12] : memref<16x8xf32, #tpu.memory_space<vmem>>, vector<4x8xf32>
    %cst = arith.constant dense<0.000000e+00> : vector<8x8xf32>
    %15 = tpu.matmul %1, %12, %cst {dimension_numbers = #tpu.dot_dimension_numbers<[1], [0], [0], [1], [0, 0, 1, 1], [], []>} : vector<8x8xf32>, vector<8x8xf32>, vector<8x8xf32> -> vector<8x8xf32>
    %cst_13 = arith.constant dense<0.000000e+00> : vector<8x8xf32>
    %16 = tpu.matmul %7, %13, %cst_13 {dimension_numbers = #tpu.dot_dimension_numbers<[1], [0], [0], [1], [0, 0, 1, 1], [], []>} : vector<8x4xf32>, vector<4x8xf32>, vector<8x8xf32> -> vector<8x8xf32>
    %17 = arith.addf %15, %16 : vector<8x8xf32>
    %cst_14 = arith.constant dense<0.000000e+00> : vector<8x8xf32>
    %18 = tpu.matmul %11, %14, %cst_14 {dimension_numbers = #tpu.dot_dimension_numbers<[1], [0], [0], [1], [0, 0, 1, 1], [], []>} : vector<8x4xf32>, vector<4x8xf32>, vector<8x8xf32> -> vector<8x8xf32>
    %19 = arith.addf %17, %18 : vector<8x8xf32>
    %c0_15 = arith.constant 0 : index
    %c0_16 = arith.constant 0 : index
    %20 = vector.load %arg5[%c0_15, %c0_16] : memref<1x8xf32, #tpu.memory_space<vmem>>, vector<1x8xf32>
    %21 = vector.broadcast %20 : vector<1x8xf32> to vector<8x8xf32>
    %22 = arith.addf %19, %21 : vector<8x8xf32>
    %c0_17 = arith.constant 0 : index
    %c0_18 = arith.constant 0 : index
    %c0_19 = arith.constant 0 : index
    %23 = vector.load %arg6[%c0_17, %c0_18, %c0_19] : memref<1x8x8xf32, #tpu.memory_space<vmem>>, vector<1x8x8xf32>
    %24 = vector.shape_cast %23 : vector<1x8x8xf32> to vector<8x8xf32>
    %25 = vector.shape_cast %22 : vector<8x8xf32> to vector<1x8x8xf32>
    tpu.vector_store %arg6[%c0_17, %c0_18, %c0_19], %25 {strides = array<i32>} : memref<1x8x8xf32, #tpu.memory_space<vmem>>, vector<1x8x8xf32>,
    return
  }
  func.func @transform_0(%arg0: i32, %arg1: i32) -> (i32, i32, i32) {
    %c0_i32 = arith.constant 0 : i32
    %c0_i32_0 = arith.constant 0 : i32
    return %arg0, %arg1, %c0_i32 : i32, i32, i32
  }
  func.func @transform_1(%arg0: i32, %arg1: i32) -> (i32, i32, i32, i32) {
    %c0_i32 = arith.constant 0 : i32
    %c0_i32_0 = arith.constant 0 : i32
    %c0_i32_1 = arith.constant 0 : i32
    return %arg0, %arg1, %c0_i32, %c0_i32_0 : i32, i32, i32, i32
  }
  func.func @transform_2(%arg0: i32, %arg1: i32) -> (i32, i32) {
    %c0_i32 = arith.constant 0 : i32
    %c0_i32_0 = arith.constant 0 : i32
    %c0_i32_1 = arith.constant 0 : i32
    return %c0_i32, %c0_i32_0 : i32, i32
  }
  func.func @transform_3(%arg0: i32, %arg1: i32) -> (i32, i32) {
    %c0_i32 = arith.constant 0 : i32
    %c0_i32_0 = arith.constant 0 : i32
    %c0_i32_1 = arith.constant 0 : i32
    return %c0_i32, %c0_i32_0 : i32, i32
  }
  func.func @transform_4(%arg0: i32, %arg1: i32) -> (i32, i32, i32) {
    %c0_i32 = arith.constant 0 : i32
    %c0_i32_0 = arith.constant 0 : i32
    return %arg0, %arg1, %c0_i32 : i32, i32, i32
  }
}

</mosaic_0001>

<llo_original>
// kernel: tpu_custom_call.1
$region0: #{tpu_custom_call.1}
  #allocation0 [shape = 'u32[]', space=smem, size = 0x4, offset = 0x4, fixed_abs, tag = 'smem constant byte address 0x4 - core index']
  #allocation1 [shape = 'u32[72,128]{1,0:T(1,128)}', space=vmem, size = 0x9000, scoped, tag = 'internal scratch']
  %s0 = inlined_call_operand.vmem [shape: f32[2,8,8], index: 0, kind: input, shape index: {}]
  %s1 = inlined_call_operand.vmem [shape: f32[2,1,2,4], index: 1, kind: input, shape index: {}]
  %s2 = inlined_call_operand.vmem [shape: f32[16,8], index: 2, kind: input, shape index: {}]
  %s3 = inlined_call_operand.vmem [shape: f32[1,8], index: 3, kind: input, shape index: {}]
  %s4 = inlined_call_operand.hbm [shape: f32[2,8,8], index: 4, kind: output, shape index: {}]
  %s5 = sld [smem:[#allocation0]]
  $region49: #{tpu_custom_call.1} parent=0
    _
  %s7 = ssub.s32 1, %s5
  %s8 = scalar_select 0, %s7, %s5
  $region1: #{tpu_custom_call.1} parent=0
    #allocation2 [shape = 'u8[8192]{0}', space=vmem, size = 0x2000, scoped, tag = 'output window, operand 0']
    #allocation3 [shape = 's32[2]{0}', space=sflag, size = 0x8, scoped, tag = 'scoped memory for tpu_custom_call.1']
    %9 = vsyncpa [#allocation3], 0
    %s10 = scalar_lea.sflag [#allocation3], 1
    %11 = vsyncpa %s10, 0
    loop: start=0, step=1, limit=4
    $region2: #{tpu_custom_call.1} parent=1 // loop_pre_header
      _
    $region3: #{tpu_custom_call.1} parent=1 // loop_header
      %s13 = sphi 0, %s17
      %p14 = scmp.ge.s32.totalorder %s13, 4
      %s20 = sphi 0, %s32
      %s21 = sphi 0, %s28
      %s22 = sphi 0, %s20
      %s23 = sphi 0, %s21
      %s24 = sphi 0, %s22
      %s25 = sphi 0, %s23
      %s37 = sphi 0, %s39
      %s40 = sphi 0, %s37
      %s41 = sphi 0, %s40
      %s57 = sphi 0, %s41
      %s65 = sphi 0, %s67
      %s68 = sphi 0, %s65
      %s69 = sphi 0, %s68
      %s85 = sphi 0, %s69
      %s89 = sphi 0, %s89
      %s91 = sphi 0, %s89
      %s92 = sphi 0, %s91
      %s106 = sphi 0, %s92
      %s110 = sphi 0, %s110
      %s112 = sphi 0, %s110
      %s113 = sphi 0, %s112
      %s127 = sphi 0, %s113
      %s135 = sphi 0, %s137
      %s138 = sphi 0, %s135
      %s139 = sphi 0, %s138
      %s155 = sphi 0, %s139
    $region4: #{tpu_custom_call.1} parent=1 // loop_header_branch
      %16 = sbr.rel (%p14) target = $region8
    $region5: #{tpu_custom_call.1} parent=1 // loop_body
      %s18 = ssub.s32 %s13, 1
      %s19 = ssub.s32 %s13, 2
      %s26 = sadd.s32 1, %s21
      %p27 = scmp.ge.s32.totalorder %s26, 1
      %s28 = scalar_select %p27, 0, %s26
      %s29 = sadd.s32 1, %s20
      %s30 = scalar_select %p27, %s29, %s20
      %p31 = scmp.ge.s32.totalorder %s30, 2
      %s32 = scalar_select %p31, 0, %s30
      %s33 = ssub.s32 %s20, %s32
      %s34 = ssub.s32 %s21, %s28
      %s35 = sor.u32 %s33, %s34
      %p36 = scmp.eq.s32.totalorder %s35, 0
      %s38 = sadd.s32 %s37, 1
      %s39 = scalar_select %p36, %s37, %s38
      %p42 = pneg %p36
      %p43 = scmp.eq.s32.totalorder %s13, 1
      %p44 = por %p42, %p43
      %p45 = scmp.ne.s32.totalorder %s37, %s40
      %p46 = scmp.eq.s32.totalorder %s13, 0
      %p47 = por %p45, %p46
      %p48 = scmp.ne.s32.totalorder %s37, %s40
      %p49 = scmp.eq.s32.totalorder %s18, 1
      %p50 = por %p48, %p49
      %p51 = scmp.ne.s32.totalorder %s40, %s41
      %p52 = scmp.eq.s32.totalorder %s18, 0
      %p53 = por %p51, %p52
      %p54 = scmp.ne.s32.totalorder %s40, %s41
      %p55 = scmp.eq.s32.totalorder %s19, 1
      %p56 = por %p54, %p55
      %p58 = scmp.ne.s32.totalorder %s41, %s57
      %p59 = scmp.eq.s32.totalorder %s19, 0
      %p60 = por %p58, %p59
      %s61 = ssub.s32 %s20, %s32
      %s62 = ssub.s32 %s21, %s28
      %s63 = sor.u32 %s61, %s62
      %p64 = scmp.eq.s32.totalorder %s63, 0
      %s66 = sadd.s32 %s65, 1
      %s67 = scalar_select %p64, %s65, %s66
      %p70 = pneg %p64
      %p71 = scmp.eq.s32.totalorder %s13, 1
      %p72 = por %p70, %p71
      %p73 = scmp.ne.s32.totalorder %s65, %s68
      %p74 = scmp.eq.s32.totalorder %s13, 0
      %p75 = por %p73, %p74
      %p76 = scmp.ne.s32.totalorder %s65, %s68
      %p77 = scmp.eq.s32.totalorder %s18, 1
      %p78 = por %p76, %p77
      %p79 = scmp.ne.s32.totalorder %s68, %s69
      %p80 = scmp.eq.s32.totalorder %s18, 0
      %p81 = por %p79, %p80
      %p82 = scmp.ne.s32.totalorder %s68, %s69
      %p83 = scmp.eq.s32.totalorder %s19, 1
      %p84 = por %p82, %p83
      %p86 = scmp.ne.s32.totalorder %s69, %s85
      %p87 = scmp.eq.s32.totalorder %s19, 0
      %p88 = por %p86, %p87
      %s90 = sadd.s32 %s89, 1
      %p93 = scmp.eq.s32.totalorder %s13, 1
      %p94 = scmp.ne.s32.totalorder %s89, %s91
      %p95 = scmp.eq.s32.totalorder %s13, 0
      %p96 = por %p94, %p95
      %p97 = scmp.ne.s32.totalorder %s89, %s91
      %p98 = scmp.eq.s32.totalorder %s18, 1
      %p99 = por %p97, %p98
      %p100 = scmp.ne.s32.totalorder %s91, %s92
      %p101 = scmp.eq.s32.totalorder %s18, 0
      %p102 = por %p100, %p101
      %p103 = scmp.ne.s32.totalorder %s91, %s92
      %p104 = scmp.eq.s32.totalorder %s19, 1
      %p105 = por %p103, %p104
      %p107 = scmp.ne.s32.totalorder %s92, %s106
      %p108 = scmp.eq.s32.totalorder %s19, 0
      %p109 = por %p107, %p108
      %s111 = sadd.s32 %s110, 1
      %p114 = scmp.eq.s32.totalorder %s13, 1
      %p115 = scmp.ne.s32.totalorder %s110, %s112
      %p116 = scmp.eq.s32.totalorder %s13, 0
      %p117 = por %p115, %p116
      %p118 = scmp.ne.s32.totalorder %s110, %s112
      %p119 = scmp.eq.s32.totalorder %s18, 1
      %p120 = por %p118, %p119
      %p121 = scmp.ne.s32.totalorder %s112, %s113
      %p122 = scmp.eq.s32.totalorder %s18, 0
      %p123 = por %p121, %p122
      %p124 = scmp.ne.s32.totalorder %s112, %s113
      %p125 = scmp.eq.s32.totalorder %s19, 1
      %p126 = por %p124, %p125
      %p128 = scmp.ne.s32.totalorder %s113, %s127
      %p129 = scmp.eq.s32.totalorder %s19, 0
      %p130 = por %p128, %p129
      %s131 = ssub.s32 %s20, %s32
      %s132 = ssub.s32 %s21, %s28
      %s133 = sor.u32 %s131, %s132
      %p134 = scmp.eq.s32.totalorder %s133, 0
      %s136 = sadd.s32 %s135, 1
      %s137 = scalar_select %p134, %s135, %s136
      %p140 = pneg %p134
      %p141 = scmp.eq.s32.totalorder %s13, 1
      %p142 = por %p140, %p141
      %p143 = scmp.ne.s32.totalorder %s135, %s138
      %p144 = scmp.eq.s32.totalorder %s13, 0
      %p145 = por %p143, %p144
      %p146 = scmp.ne.s32.totalorder %s135, %s138
      %p147 = scmp.eq.s32.totalorder %s18, 1
      %p148 = por %p146, %p147
      %p149 = scmp.ne.s32.totalorder %s138, %s139
      %p150 = scmp.eq.s32.totalorder %s18, 0
      %p151 = por %p149, %p150
      %p152 = scmp.ne.s32.totalorder %s138, %s139
      %p153 = scmp.eq.s32.totalorder %s19, 1
      %p154 = por %p152, %p153
      %p156 = scmp.ne.s32.totalorder %s139, %s155
      %p157 = scmp.eq.s32.totalorder %s19, 0
      %p158 = por %p156, %p157
      %p159 = scmp.le.s32.totalorder 1, %s13
      %p160 = scmp.lt.s32.totalorder %s13, 3
      %p161 = pnand %p159, %p160
      %p162 = pneg %p161
      // Predicated region
      $region9: #{tpu_custom_call.1} parent=5 // pred_check
        _
      $region10: #{tpu_custom_call.1} parent=5 // pred_check_branch
        %164 = sbr.rel (%p161) target = $region12
      $region11: #{tpu_custom_call.1} parent=5 // pred_region
        %s165 = ssub.s32 %s13, 1
        // Predicated region
        $region13: #{tpu_custom_call.1} parent=11 // pred_check
          %p166 = pneg %p102
        $region14: #{tpu_custom_call.1} parent=11 // pred_check_branch
          %168 = sbr.rel (%p166) target = $region16
        $region15: #{tpu_custom_call.1} parent=11 // pred_region
          _
        $region16: #{tpu_custom_call.1} parent=11 // pred_fallthru
          _
        // Predicated region
        $region17: #{tpu_custom_call.1} parent=11 // pred_check
          %p169 = pneg %p123
        $region18: #{tpu_custom_call.1} parent=11 // pred_check_branch
          %171 = sbr.rel (%p169) target = $region20
        $region19: #{tpu_custom_call.1} parent=11 // pred_region
          _
        $region20: #{tpu_custom_call.1} parent=11 // pred_fallthru
          _
      $region12: #{tpu_custom_call.1} parent=5 // pred_fallthru
        _
      %p172 = scmp.lt.s32.totalorder %s13, 2
      // Predicated region
      $region21: #{tpu_custom_call.1} parent=5 // pred_check
        %p173 = pneg %p172
      $region22: #{tpu_custom_call.1} parent=5 // pred_check_branch
        %175 = sbr.rel (%p173) target = $region24
      $region23: #{tpu_custom_call.1} parent=5 // pred_region
        // Predicated region
        $region25: #{tpu_custom_call.1} parent=23 // pred_check
          %p176 = pneg %p47
        $region26: #{tpu_custom_call.1} parent=23 // pred_check_branch
          %178 = sbr.rel (%p176) target = $region28
        $region27: #{tpu_custom_call.1} parent=23 // pred_region
          %p179 = scmp.lt.s32.totalorder %s20, 1
          %s180 = scalar_select %p179, %s20, 1
          %p181 = scmp.lt.s32.totalorder %s21, 0
          %s182 = scalar_select %p181, %s21, 0
          %s183 = sadd.s32 %s182, %s180
          %s184 = smul.addr %s183, 8
          %s185 = scalar_lea.vmem %s0, %s184
        $region28: #{tpu_custom_call.1} parent=23 // pred_fallthru
          _
        // Predicated region
        $region29: #{tpu_custom_call.1} parent=23 // pred_check
          %p186 = pneg %p75
        $region30: #{tpu_custom_call.1} parent=23 // pred_check_branch
          %188 = sbr.rel (%p186) target = $region32
        $region31: #{tpu_custom_call.1} parent=23 // pred_region
          %p189 = scmp.lt.s32.totalorder %s20, 1
          %s190 = scalar_select %p189, %s20, 1
          %p191 = scmp.lt.s32.totalorder %s21, 0
          %s192 = scalar_select %p191, %s21, 0
          %s193 = sadd.s32 %s192, %s190
          %s194 = smul.addr %s193, 2
          %s195 = scalar_lea.vmem %s1, %s194
        $region32: #{tpu_custom_call.1} parent=23 // pred_fallthru
          _
      $region24: #{tpu_custom_call.1} parent=5 // pred_fallthru
        _
      %p196 = scmp.le.s32.totalorder 1, %s13
      %p197 = scmp.lt.s32.totalorder %s13, 3
      %p198 = pnand %p196, %p197
      %p199 = pneg %p198
      // Predicated region
      $region33: #{tpu_custom_call.1} parent=5 // pred_check
        _
      $region34: #{tpu_custom_call.1} parent=5 // pred_check_branch
        %201 = sbr.rel (%p198) target = $region36
      $region35: #{tpu_custom_call.1} parent=5 // pred_region
        %s202 = ssub.s32 %s13, 1
        %p203 = scmp.lt.s32.totalorder %s22, 1
        %s204 = scalar_select %p203, %s22, 1
        %p205 = scmp.lt.s32.totalorder %s23, 0
        %s206 = scalar_select %p205, %s23, 0
        %s207 = sadd.s32 %s206, %s204
        %s208 = smul.addr %s207, 8
        %s209 = scalar_lea.vmem %s0, %s208
        %p210 = pneg %p53
        %p211 = pneg %p50
        %p212 = scmp.lt.s32.totalorder %s22, 1
        %s213 = scalar_select %p212, %s22, 1
        %p214 = scmp.lt.s32.totalorder %s23, 0
        %s215 = scalar_select %p214, %s23, 0
        %s216 = sadd.s32 %s215, %s213
        %s217 = smul.addr %s216, 2
        %s218 = scalar_lea.vmem %s1, %s217
        %p219 = pneg %p81
        %p220 = pneg %p78
        %p221 = pneg %p102
        %p222 = pneg %p99
        %p223 = pneg %p123
        %p224 = pneg %p120
        %p225 = pneg %p151
        %p226 = pneg %p148
        %s227 = sand.u32 %s138, 1
        %s228 = scalar_lea.sflag [#allocation3], %s227
        %s229 = sand.u32 %s138, 1
        %s230 = smul.addr %s229, 8
        %s231 = scalar_lea.vmem [#allocation2], %s230
        %p232 = scmp.lt.s32.totalorder %s22, 1
        %s233 = scalar_select %p232, %s22, 1
        %p234 = scmp.lt.s32.totalorder %s23, 0
        %s235 = scalar_select %p234, %s23, 0
        %s236 = sadd.s32 %s235, %s233
        %s237 = smul.addr %s236, 8
        %s238 = scalar_lea.vmem %s0, %s237
        %p239 = scmp.lt.s32.totalorder %s22, 1
        %s240 = scalar_select %p239, %s22, 1
        %p241 = scmp.lt.s32.totalorder %s23, 0
        %s242 = scalar_select %p241, %s23, 0
        %s243 = sadd.s32 %s242, %s240
        %s244 = smul.addr %s243, 2
        %s245 = scalar_lea.vmem %s1, %s244
        %v246 = vld [vmem:[%s238] sm:$0xff]
        %v247 = vld [vmem:[%s245] sm:$0x1]
        %v249 = vrot.slane %v246, 7
        %250 = vrot.lane.b32.xlu0 %v249, 124
        %v251 = vpop.permute.xlu0 %250
        %vm253 = vcmask 1040384
        %v254 = vsel %vm253, %v247, %v251
        %v255 = vld [vmem:[%s245 + $0x1] sm:$0x1]
        %v256 = vrot.slane %v246, 1
        %v259 = vrot.slane %v255, 1
        %vm261 = vcmask 1046528
        %v262 = vsel %vm261, %v256, %v259
        %v263 = vld [vmem:[%s2] sm:$0xff]
        %v264 = vld [vmem:[%s2 + $0x8] sm:$0xf]
        %v265 = vld [vmem:[%s2 + $0xc] sm:$0xf]
        %vm266 = vcmask 31744
        %v268 = vsel %vm266, %v254, 0
        %vm270 = vcmask 1043456
        %v272 = vsel %vm270, %v264, 0
        %274 = vmatpush.msra.mxu0 0.0
        %275 = vmatpush.msra.mxu0 0.0
        %276 = vmatpush.msra.mxu0 0.0
        %277 = vmatpush.msra.mxu0 0.0
        %278 = vmatpush.msra.mxu0 0.0
        %279 = vmatpush.msra.mxu0 0.0
        %280 = vmatpush.msra.mxu0 0.0
        %281 = vmatpush.msra.mxu0 0.0
        %282 = vmatpush.msra.mxu0 0.0
        %283 = vmatpush.msra.mxu0 0.0
        %284 = vmatpush.msra.mxu0 0.0
        %285 = vmatpush.msra.mxu0 0.0
        %286 = vmatpush.msra.mxu0 0.0
        %287 = vmatpush.msra.mxu0 0.0
        %288 = vmatpush.msra.mxu0 0.0
        %289 = vmatpush.msra.mxu0 %v272
        %290 = vmatmul.f32.gmra.mxu0 %v268
        %v291 = vpop.f32.mrf.mxu0
        %v292 = vadd.f32 0.0, %v291
        %293 = vdwg.mxu0
        %vm294 = vcmask 64512
        %v295 = vsel %vm294, %v246, 0
        %297 = vmatpush.msra.mxu0 0.0
        %298 = vmatpush.msra.mxu0 0.0
        %299 = vmatpush.msra.mxu0 0.0
        %300 = vmatpush.msra.mxu0 0.0
        %301 = vmatpush.msra.mxu0 0.0
        %302 = vmatpush.msra.mxu0 0.0
        %303 = vmatpush.msra.mxu0 0.0
        %304 = vmatpush.msra.mxu0 0.0
        %305 = vmatpush.msra.mxu0 0.0
        %306 = vmatpush.msra.mxu0 0.0
        %307 = vmatpush.msra.mxu0 0.0
        %308 = vmatpush.msra.mxu0 0.0
        %309 = vmatpush.msra.mxu0 0.0
        %310 = vmatpush.msra.mxu0 0.0
        %311 = vmatpush.msra.mxu0 0.0
        %312 = vmatpush.msra.mxu0 %v263
        %313 = vmatmul.f32.gmra.mxu0 %v295
        %v314 = vpop.f32.mrf.mxu0
        %v315 = vadd.f32 %v292, %v314
        %316 = vdwg.mxu0
        %v318 = vsel %vm266, %v262, 0
        %v321 = vsel %vm270, %v265, 0
        %323 = vmatpush.msra.mxu0 0.0
        %324 = vmatpush.msra.mxu0 0.0
        %325 = vmatpush.msra.mxu0 0.0
        %326 = vmatpush.msra.mxu0 0.0
        %327 = vmatpush.msra.mxu0 0.0
        %328 = vmatpush.msra.mxu0 0.0
        %329 = vmatpush.msra.mxu0 0.0
        %330 = vmatpush.msra.mxu0 0.0
        %331 = vmatpush.msra.mxu0 0.0
        %332 = vmatpush.msra.mxu0 0.0
        %333 = vmatpush.msra.mxu0 0.0
        %334 = vmatpush.msra.mxu0 0.0
        %335 = vmatpush.msra.mxu0 0.0
        %336 = vmatpush.msra.mxu0 0.0
        %337 = vmatpush.msra.mxu0 0.0
        %338 = vmatpush.msra.mxu0 %v321
        %339 = vmatmul.f32.gmra.mxu0 %v318
        %v340 = vpop.f32.mrf.mxu0
        %v341 = vadd.f32 0.0, %v340
        %342 = vdwg.mxu0
        %v343 = vadd.f32 %v315, %v341
        %v344 = vld [vmem:[%s3] sm:$0x1]
        %v346 = vperm.slane %v344, 0
        %v348 = vadd.f32 %v343, %v346
        %349 = vst.msk [vmem:[%s231] sm:$0xff] %vm294, %v348
        %s350 = sand.u32 %s138, 1
        %s351 = scalar_lea.sflag [#allocation3], %s350
        %s352 = sand.u32 %s138, 1
        %s353 = smul.addr %s352, 8
        %s354 = scalar_lea.vmem [#allocation2], %s353
        // Predicated region
        $region37: #{tpu_custom_call.1} parent=35 // pred_check
          %p355 = pneg %p148
        $region38: #{tpu_custom_call.1} parent=35 // pred_check_branch
          %357 = sbr.rel (%p355) target = $region40
        $region39: #{tpu_custom_call.1} parent=35 // pred_region
          %359 = vsyncadd %s351, 0
          %s360 = sadd.s32 %s23, %s22
          %s361 = smul.addr %s360, 8
          %s362 = scalar_lea.hbm %s4, %s361
          %s364 = sshll.u32 %s354, 4
          %s365 = int_to_ptr.vmem [resolvable:$true] %s364
          %s366 = sshll.u32 %s362, 4
          %s367 = int_to_ptr.hbm [resolvable:$true] %s366
          %369 = dma.vmem_to_hbm [thread:$0]  %s365, 128, %s367, %s351
        $region40: #{tpu_custom_call.1} parent=35 // pred_fallthru
          _
      $region36: #{tpu_custom_call.1} parent=5 // pred_fallthru
        _
      %p370 = scmp.le.s32.totalorder 2, %s13
      // Predicated region
      $region41: #{tpu_custom_call.1} parent=5 // pred_check
        %p371 = pneg %p370
      $region42: #{tpu_custom_call.1} parent=5 // pred_check_branch
        %373 = sbr.rel (%p371) target = $region44
      $region43: #{tpu_custom_call.1} parent=5 // pred_region
        %s374 = ssub.s32 %s13, 2
        // Predicated region
        $region45: #{tpu_custom_call.1} parent=43 // pred_check
          %p375 = pneg %p154
        $region46: #{tpu_custom_call.1} parent=43 // pred_check_branch
          %377 = sbr.rel (%p375) target = $region48
        $region47: #{tpu_custom_call.1} parent=43 // pred_region
          %s378 = sand.u32 %s139, 1
          %s379 = scalar_lea.sflag [#allocation3], %s378
          %s380 = sand.u32 %s139, 1
          %s381 = smul.addr %s380, 8
          %s382 = scalar_lea.vmem [#allocation2], %s381
          %384 = dma.done %s379, 128
        $region48: #{tpu_custom_call.1} parent=43 // pred_fallthru
          _
      $region44: #{tpu_custom_call.1} parent=5 // pred_fallthru
        _
    $region6: #{tpu_custom_call.1} parent=1 // loop_footer
      %s17 = sadd.s32 1, %s13
    $region7: #{tpu_custom_call.1} parent=1 // loop_footer_branch
      %12 = sbr.rel target = $region3
    $region8: #{tpu_custom_call.1} parent=1 // loop_exit
      _
    %385 = vsyncpa [#allocation3], 1
    %s386 = scalar_lea.sflag [#allocation3], 1
    %387 = vsyncpa %s386, 1

</llo_original>
